<compile_context>
chip_gen: v5e
topology: v5e:2x2
jax: 0.10.0
libtpu: 0.0.40
codegen_flags: <defaults>
</compile_context>

<pallas_src>
import jax
import jax.numpy as jnp
from jax import lax
from jax.experimental import pallas as pl
from jax.experimental.pallas import tpu as pltpu


def _round_up(n, m):
    return ((n + m - 1) // m) * m


def classifier_kernel(x_ref, w_ref, mask_ref, b_ref, out_ref):
    # x_ref:    (TM, H)   activation tile (native dtype)
    # w_ref:    (1, H)    linear weight row (same dtype as x)
    # mask_ref: (1, TM)   float mask, lane-dense
    # b_ref:    (1,)      bias scalar in SMEM
    # out_ref:  (1, TM)   sigmoid(x @ w^T + b) * mask, lane-dense
    x = x_ref[...]
    w = w_ref[...]
    # (1,H) contracted with (TM,H) over H -> (1,TM): lane-dense result straight
    # off the MXU (same transposed-RHS config as q @ k^T), f32 accumulation.
    h = lax.dot_general(
        w, x,
        dimension_numbers=(((1,), (1,)), ((), ())),
        preferred_element_type=jnp.float32,
    )
    h = h + b_ref[0]
    out_ref[...] = jax.nn.sigmoid(h) * mask_ref[...]


def classifier_forward(x, mask_cls, weight, bias, *, block_m=512):
    """x: (B, S, H) any float dtype; mask_cls: (B, S) numeric/bool;
    weight: (1, H) like nn.Linear(H, 1).weight; bias: (1,)."""
    B, S, H = x.shape
    M = B * S
    act_dtype = x.dtype

    # Tile rows: multiple of 128 (lane-dense output blocks), shrink for tiny M.
    TM = min(block_m, _round_up(max(M, 1), 128))
    M_pad = _round_up(M, TM)
    grid_m = M_pad // TM

    x2 = x.reshape(M, H)
    mask2 = mask_cls.astype(jnp.float32).reshape(1, M)
    if M_pad != M:
        x2 = jnp.pad(x2, ((0, M_pad - M), (0, 0)))
        mask2 = jnp.pad(mask2, ((0, 0), (0, M_pad - M)))  # padded rows masked to 0

    w2 = weight.reshape(1, H).astype(act_dtype)   # keep MXU operands in matching dtype
    b2 = bias.reshape(1).astype(jnp.float32)      # scalar bias -> SMEM

    itemsize = jnp.dtype(act_dtype).itemsize
    cost = pl.CostEstimate(
        flops=2 * M_pad * H,
        transcendentals=M_pad,                      # sigmoid
        bytes_accessed=M_pad * H * itemsize         # x
        + M_pad * 4 + M_pad * 4                     # mask + out (f32)
        + H * itemsize + 4,                         # weight + bias
    )

    out = pl.pallas_call(
        classifier_kernel,
        out_shape=jax.ShapeDtypeStruct((1, M_pad), jnp.float32),
        grid=(grid_m,),
        in_specs=[
            pl.BlockSpec((TM, H), lambda i: (i, 0)),             # x tile
            pl.BlockSpec((1, H), lambda i: (0, 0)),              # weight (resident)
            pl.BlockSpec((1, TM), lambda i: (0, i)),             # mask slab
            pl.BlockSpec(memory_space=pltpu.MemorySpace.SMEM),   # bias scalar
        ],
        out_specs=pl.BlockSpec((1, TM), lambda i: (0, i)),
        compiler_params=pltpu.CompilerParams(
            dimension_semantics=("parallel",),
        ),
        cost_estimate=cost,
    )(x2, w2, mask2, b2)

    # torch: .squeeze(-1) then mask  ==  reshape back to (B, S)
    return out[0, :M].reshape(B, S)


if __name__ == "__main__":
    # Small shapes consistent with the module: batch=2, sentences=8, hidden=32
    B, S, H = 2, 8, 32

    key = jax.random.PRNGKey(0)
    kx, km, kw, kb = jax.random.split(key, 4)

    x = jax.random.normal(kx, (B, S, H), dtype=jnp.float32)
    mask_cls = (jax.random.uniform(km, (B, S)) > 0.3).astype(jnp.float32)

    # Synthetic nn.Linear(hidden_size, 1) parameters.
    bound = 1.0 / (H ** 0.5)
    weight = jax.random.uniform(kw, (1, H), minval=-bound, maxval=bound, dtype=jnp.float32)
    bias = jax.random.uniform(kb, (1,), minval=-bound, maxval=bound, dtype=jnp.float32)

    sent_scores = classifier_forward(x, mask_cls, weight, bias)
    sent_scores = jax.block_until_ready(sent_scores)

    # Pure-JAX reference for semantics.
    ref = jax.nn.sigmoid(jnp.einsum("bsh,h->bs", x, weight[0]) + bias[0]) * mask_cls
    assert sent_scores.shape == (B, S)
    assert jnp.allclose(sent_scores, ref, atol=1e-5, rtol=1e-5)

    print("KERNEL_OK")
</pallas_src>

<mosaic_0001>
module attributes {stable_mosaic.version = 11 : i64} {
  func.func @classifier_kernel(%arg0: i32, %arg1: memref<128x32xf32, #tpu.memory_space<vmem>>, %arg2: memref<1x32xf32, #tpu.memory_space<vmem>>, %arg3: memref<1x128xf32, #tpu.memory_space<vmem>>, %arg4: memref<1xf32, #tpu.memory_space<smem>>, %arg5: memref<1x128xf32, #tpu.memory_space<vmem>>) attributes {dimension_semantics = [#tpu.dimension_semantics<parallel>], iteration_bounds = array<i64: 1>, scalar_prefetch = 0 : i64, scratch_operands = 0 : i64, tpu.core_type = #tpu.core_type<tc>, window_params = [{transform_indices = @transform_0, window_bounds = array<i64: 128, 32>}, {pipeline_mode = #tpu.pipeline_mode<synchronous>, transform_indices = @transform_1, window_bounds = array<i64: 1, 32>}, {transform_indices = @transform_2, window_bounds = array<i64: 1, 128>}, {transform_indices = @transform_3, window_bounds = array<i64: 1>}, {transform_indices = @transform_4, window_bounds = array<i64: 1, 128>}]} {
    %c0 = arith.constant 0 : index
    %c0_0 = arith.constant 0 : index
    %0 = vector.load %arg1[%c0, %c0_0] : memref<128x32xf32, #tpu.memory_space<vmem>>, vector<128x32xf32>
    %c0_1 = arith.constant 0 : index
    %c0_2 = arith.constant 0 : index
    %1 = vector.load %arg2[%c0_1, %c0_2] : memref<1x32xf32, #tpu.memory_space<vmem>>, vector<1x32xf32>
    %cst = arith.constant dense<0.000000e+00> : vector<1x128xf32>
    %2 = tpu.matmul %1, %0, %cst {dimension_numbers = #tpu.dot_dimension_numbers<[1], [1], [0], [0], [0, 0, 1, 0], [], []>} : vector<1x32xf32>, vector<128x32xf32>, vector<1x128xf32> -> vector<1x128xf32>
    %c0_3 = arith.constant 0 : index
    %3 = memref.load %arg4[%c0_3] : memref<1xf32, #tpu.memory_space<smem>>
    %4 = vector.broadcast %3 : f32 to vector<1x128xf32>
    %5 = arith.addf %2, %4 : vector<1x128xf32>
    %6 = arith.negf %5 : vector<1x128xf32>
    %7 = math.exp %6 : vector<1x128xf32>
    %cst_4 = arith.constant 1.000000e+00 : f32
    %8 = vector.broadcast %cst_4 : f32 to vector<1x128xf32>
    %9 = arith.addf %8, %7 : vector<1x128xf32>
    %10 = arith.divf %8, %9 : vector<1x128xf32>
    %c0_5 = arith.constant 0 : index
    %c0_6 = arith.constant 0 : index
    %11 = vector.load %arg3[%c0_5, %c0_6] : memref<1x128xf32, #tpu.memory_space<vmem>>, vector<1x128xf32>
    %12 = arith.mulf %10, %11 : vector<1x128xf32>
    %c0_7 = arith.constant 0 : index
    %c0_8 = arith.constant 0 : index
    %13 = vector.load %arg5[%c0_7, %c0_8] : memref<1x128xf32, #tpu.memory_space<vmem>>, vector<1x128xf32>
    tpu.vector_store %arg5[%c0_7, %c0_8], %12 {strides = array<i32>} : memref<1x128xf32, #tpu.memory_space<vmem>>, vector<1x128xf32>,
    return
  }
  func.func @transform_0(%arg0: i32) -> (i32, i32) {
    %c0_i32 = arith.constant 0 : i32
    %c0_i32_0 = arith.constant 0 : i32
    return %arg0, %c0_i32 : i32, i32
  }
  func.func @transform_1(%arg0: i32) -> (i32, i32) {
    %c0_i32 = arith.constant 0 : i32
    %c0_i32_0 = arith.constant 0 : i32
    %c0_i32_1 = arith.constant 0 : i32
    return %c0_i32, %c0_i32_0 : i32, i32
  }
  func.func @transform_2(%arg0: i32) -> (i32, i32) {
    %c0_i32 = arith.constant 0 : i32
    %c0_i32_0 = arith.constant 0 : i32
    return %c0_i32, %arg0 : i32, i32
  }
  func.func @transform_3(%arg0: i32) -> i32 {
    %c0_i32 = arith.constant 0 : i32
    %c0_i32_0 = arith.constant 0 : i32
    return %c0_i32 : i32
  }
  func.func @transform_4(%arg0: i32) -> (i32, i32) {
    %c0_i32 = arith.constant 0 : i32
    %c0_i32_0 = arith.constant 0 : i32
    return %c0_i32, %arg0 : i32, i32
  }
}

</mosaic_0001>

<llo_original>
// kernel: tpu_custom_call.1
$region0: #{tpu_custom_call.1}
  #allocation0 [shape = 'u32[]', space=smem, size = 0x4, offset = 0x4, fixed_abs, tag = 'smem constant byte address 0x4 - core index']
  #allocation1 [shape = 'u32[72,128]{1,0:T(1,128)}', space=vmem, size = 0x9000, scoped, tag = 'internal scratch']
  #allocation2 [shape = 'f32[1]{0:T(128)S(6)}', space=smem, size = 0x200, scoped, tag = 'scoped memory for tpu_custom_call.1']
  %s0 = inlined_call_operand.vmem [shape: f32[128,32], index: 0, kind: input, shape index: {}]
  %s1 = inlined_call_operand.vmem [shape: f32[1,32], index: 1, kind: input, shape index: {}]
  %s2 = inlined_call_operand.vmem [shape: f32[1,128], index: 2, kind: input, shape index: {}]
  %s3 = inlined_call_operand.<no memory space> [shape: f32[1], index: 3, kind: input, shape index: {}]
  %s4 = inlined_call_operand.hbm [shape: f32[1,128], index: 4, kind: output, shape index: {}]
  %s5 = sld [smem:[#allocation0]]
  $region26: #{tpu_custom_call.1} parent=0
    _
  %s7 = ssub.s32 1, %s5
  %s8 = scalar_select 0, %s7, %s5
  %9 = sst [smem:[#allocation2]] %s3
  $region1: #{tpu_custom_call.1} parent=0
    #allocation3 [shape = 'u8[512]{0}', space=vmem, size = 0x400, scoped, tag = 'output window, operand 0, single buffered']
    #allocation4 [shape = 's32[1]{0}', space=sflag, size = 0x4, scoped, tag = 'scoped memory for tpu_custom_call.1']
    %10 = vsyncpa [#allocation4], 0
    // Predicated region
    $region2: #{tpu_custom_call.1} parent=1 // pred_check
      _
    $region3: #{tpu_custom_call.1} parent=1 // pred_check_branch
      %12 = sbr.rel (0) target = $region5
    $region4: #{tpu_custom_call.1} parent=1 // pred_region
      _
    $region5: #{tpu_custom_call.1} parent=1 // pred_fallthru
      _
    // Predicated region
    $region6: #{tpu_custom_call.1} parent=1 // pred_check
      _
    $region7: #{tpu_custom_call.1} parent=1 // pred_check_branch
      %14 = sbr.rel (0) target = $region9
    $region8: #{tpu_custom_call.1} parent=1 // pred_region
      _
    $region9: #{tpu_custom_call.1} parent=1 // pred_fallthru
      _
    // Predicated region
    $region10: #{tpu_custom_call.1} parent=1 // pred_check
      _
    $region11: #{tpu_custom_call.1} parent=1 // pred_check_branch
      %16 = sbr.rel (0) target = $region13
    $region12: #{tpu_custom_call.1} parent=1 // pred_region
      _
    $region13: #{tpu_custom_call.1} parent=1 // pred_fallthru
      _
    // Predicated region
    $region14: #{tpu_custom_call.1} parent=1 // pred_check
      _
    $region15: #{tpu_custom_call.1} parent=1 // pred_check_branch
      %18 = sbr.rel (0) target = $region17
    $region16: #{tpu_custom_call.1} parent=1 // pred_region
      _
    $region17: #{tpu_custom_call.1} parent=1 // pred_fallthru
      _
    %v19 = vld [vmem:[%s0] sm:$0xff]
    %v20 = vld [vmem:[%s0 + $0x8] sm:$0xff]
    %v21 = vld [vmem:[%s0 + $0x10] sm:$0xff]
    %v22 = vld [vmem:[%s0 + $0x18] sm:$0xff]
    %v23 = vld [vmem:[%s0 + $0x20] sm:$0xff]
    %v24 = vld [vmem:[%s0 + $0x28] sm:$0xff]
    %v25 = vld [vmem:[%s0 + $0x30] sm:$0xff]
    %v26 = vld [vmem:[%s0 + $0x38] sm:$0xff]
    %v27 = vld [vmem:[%s0 + $0x40] sm:$0xff]
    %v28 = vld [vmem:[%s0 + $0x48] sm:$0xff]
    %v29 = vld [vmem:[%s0 + $0x50] sm:$0xff]
    %v30 = vld [vmem:[%s0 + $0x58] sm:$0xff]
    %v31 = vld [vmem:[%s0 + $0x60] sm:$0xff]
    %v32 = vld [vmem:[%s0 + $0x68] sm:$0xff]
    %v33 = vld [vmem:[%s0 + $0x70] sm:$0xff]
    %v34 = vld [vmem:[%s0 + $0x78] sm:$0xff]
    %v35 = vld [vmem:[%s1] sm:$0x1]
    %s36 = sld [smem:[#allocation2]]
    %v37 = vstv %s36
    %vm38 = vcmask 261120
    %v40 = vsel %vm38, %v35, 0
    %v43 = vsel %vm38, %v19, 0
    %v46 = vsel %vm38, %v20, 0
    %v49 = vsel %vm38, %v21, 0
    %v52 = vsel %vm38, %v22, 0
    %v55 = vsel %vm38, %v23, 0
    %v58 = vsel %vm38, %v24, 0
    %v61 = vsel %vm38, %v25, 0
    %v64 = vsel %vm38, %v26, 0
    %v67 = vsel %vm38, %v27, 0
    %v70 = vsel %vm38, %v28, 0
    %v73 = vsel %vm38, %v29, 0
    %v76 = vsel %vm38, %v30, 0
    %v79 = vsel %vm38, %v31, 0
    %v82 = vsel %vm38, %v32, 0
    %v85 = vsel %vm38, %v33, 0
    %v88 = vsel %vm38, %v34, 0
    %90 = vmatpush.xpose.msra.mxu0 %v88
    %91 = vmatpush.xpose.msra.mxu0 %v85
    %92 = vmatpush.xpose.msra.mxu0 %v82
    %93 = vmatpush.xpose.msra.mxu0 %v79
    %94 = vmatpush.xpose.msra.mxu0 %v76
    %95 = vmatpush.xpose.msra.mxu0 %v73
    %96 = vmatpush.xpose.msra.mxu0 %v70
    %97 = vmatpush.xpose.msra.mxu0 %v67
    %98 = vmatpush.xpose.msra.mxu0 %v64
    %99 = vmatpush.xpose.msra.mxu0 %v61
    %100 = vmatpush.xpose.msra.mxu0 %v58
    %101 = vmatpush.xpose.msra.mxu0 %v55
    %102 = vmatpush.xpose.msra.mxu0 %v52
    %103 = vmatpush.xpose.msra.mxu0 %v49
    %104 = vmatpush.xpose.msra.mxu0 %v46
    %105 = vmatpush.xpose.msra.mxu0 %v43
    %106 = vmatmul.f32.gmra.mxu0 %v40
    %v107 = vpop.f32.mrf.mxu0
    %v108 = vadd.f32 %v37, %v107
    %109 = vdwg.mxu0
    %v110 = vxor.u32 %v108, 2147483648
    %v111 = vmul.f32 %v110, 1.442695
    %v112 = vpow.pop %v111
    %v113 = vadd.f32 %v112, 1.0
    %v114 = vrcp.pop %v113
    %v115 = vmul.f32 %v113, %v114
    %v116 = vsub.f32 1.0, %v115
    %v117 = vmul.f32 %v114, %v116
    %v118 = vadd.f32 %v114, %v117
    %vm119 = vweird.f32 %v113
    %vm120 = vweird.f32 %v114
    %vm121 = vmor %vm119, %vm120
    %v122 = vsel %vm121, %v114, %v118
    %v123 = vand.u32 2147483647, %v113
    %vm124 = vcmp.eq.f32.partialorder %v123, 8.507059e+37
    %v125 = vand.u32 %v113, 2147483648
    %v126 = vor.u32 1.1754944e-38, %v125
    %v127 = vsel %vm124, %v126, %v122
    %v128 = vmul.f32 1.0, %v127
    %v129 = vld [vmem:[%s2] sm:$0x1]
    %v130 = vmul.f32 %v128, %v129
    %131 = vst [vmem:[#allocation3] sm:$0x1] %v130
    // Predicated region
    $region18: #{tpu_custom_call.1} parent=1 // pred_check
      _
    $region19: #{tpu_custom_call.1} parent=1 // pred_check_branch
      %133 = sbr.rel (0) target = $region21
    $region20: #{tpu_custom_call.1} parent=1 // pred_region
      %135 = vsyncadd [#allocation4], 0
      %s137 = sshll.u32 [#allocation3], 4
      %s138 = int_to_ptr.vmem [resolvable:$true] %s137
      %s139 = sshll.u32 %s4, 4
      %s140 = int_to_ptr.hbm [resolvable:$true] %s139
      %142 = dma.vmem_to_hbm [thread:$0]  %s138, 16, %s140, [#allocation4]
    $region21: #{tpu_custom_call.1} parent=1 // pred_fallthru
      _
    // Predicated region
    $region22: #{tpu_custom_call.1} parent=1 // pred_check
      _
    $region23: #{tpu_custom_call.1} parent=1 // pred_check_branch
      %144 = sbr.rel (0) target = $region25
    $region24: #{tpu_custom_call.1} parent=1 // pred_region
      %146 = dma.done [#allocation4], 16
    $region25: #{tpu_custom_call.1} parent=1 // pred_fallthru
      _
    %147 = vsyncpa [#allocation4], 1

</llo_original>
